<compile_context>
chip_gen: v7x
topology: tpu7x:2x2x1
jax: 0.10.0
libtpu: 0.0.40
codegen_flags: <defaults>
</compile_context>

<pallas_src>
import jax
import jax.numpy as jnp
from jax.experimental import pallas as pl
from jax.experimental.pallas import tpu as pltpu


def gcn_kernel(x_ref, w_ref, wc_ref, shift_ref, o_ref):
    # x_ref    : [bt, C, Np]   bf16  (channels-first, N lane-dense)
    # w_ref    : [bt, 1, Np]   f32
    # wc_ref   : [Cout, Cin]   bf16  (BN scale folded in)
    # shift_ref: [Cout, 1]     f32   (BN shift + conv bias folded in)
    # o_ref    : [bt, Cout, Np] bf16
    wv = jnp.maximum(jnp.tanh(w_ref[...]), 0.0)          # w' = relu(tanh(w))
    s = jnp.sum(wv, axis=-1, keepdims=True)              # [bt, 1, 1]
    dinv = jax.lax.rsqrt(wv * s + 1.0)                   # d^{-1/2}  (d >= 1)
    u = wv * dinv                                        # [bt, 1, Np]
    dinv2 = dinv * dinv                                  # 1 / d

    wc = wc_ref[...]                                     # stationary bf16 [C, C]
    shift = shift_ref[...]                               # f32 [C, 1]

    bt = x_ref.shape[0]
    for b in range(bt):                                  # static unroll, bt <= 8
        xb = x_ref[b].astype(jnp.float32)                # [C, Np]
        ub = u[b]                                        # [1, Np]
        # y = L @ x,  L = D^{-1/2}(w'w'^T + I)D^{-1/2}:
        #   y[c, i] = u_i * (x[c, :] . u) + x[c, i] / d_i
        coef = jnp.sum(xb * ub, axis=-1, keepdims=True)  # [C, 1]
        y = coef * ub + xb * dinv2[b]                    # [C, Np] (vregs only)
        # fused 1x1 conv (bias folded) + BN (folded) + ReLU epilogue
        z = jnp.dot(wc, y.astype(jnp.bfloat16),
                    preferred_element_type=jnp.float32)  # [Cout, Np]
        o_ref[b] = jnp.maximum(z + shift, 0.0).astype(o_ref.dtype)


def gcn_forward(x_nchw, w, conv_w, conv_b, bn_gamma, bn_beta,
                bn_mean, bn_var, eps=1e-5, block_b=None):
    """x_nchw: [B, C, N, 1], w: [B, N].  Returns [B, C, N, 1] (matches PyTorch)."""
    B, C, N, _ = x_nchw.shape
    out_dtype = x_nchw.dtype

    # Accept either the squeezed [C_out, C_in] or raw Conv2d [C_out, C_in, 1, 1].
    conv_w = jnp.asarray(conv_w)
    if conv_w.ndim == 4:
        conv_w = conv_w[:, :, 0, 0]

    # Fold eval-mode BatchNorm and the conv bias into weight / shift:
    #   out = relu( (scale*Wc) @ y + (beta - mean*scale + scale*bias) )
    scale = bn_gamma / jnp.sqrt(bn_var + eps)                       # [C]
    wc_fold = (scale[:, None] * conv_w).astype(jnp.bfloat16)        # [C, C] bf16
    shift_fold = (bn_beta - bn_mean * scale + scale * conv_b)       # [C]
    shift_fold = shift_fold.reshape(C, 1).astype(jnp.float32)

    # Lane-dense padding of N (zeros are algebraically exact here).
    Np = pl.cdiv(N, 128) * 128

    # Batch block: ~6 MiB of bf16 x per step, >=2 grid steps (so the "parallel"
    # batch axis can shard across v7x's two TensorCores), short static unroll.
    # B is zero-padded to a multiple of bt instead of searching for a divisor.
    if block_b is None:
        per_b = C * Np * 2                        # bf16 x bytes per batch elem
        bt = max(1, (6 << 20) // max(per_b, 1))
        bt = min(bt, max(1, B // 2), 8, B)
    else:
        bt = block_b
    Bp = pl.cdiv(B, bt) * bt

    # bf16 HBM traffic for x; w stays f32 (tiny) for an exact degree/projection.
    xb = x_nchw.reshape(B, C, N).astype(jnp.bfloat16)
    xb = jnp.pad(xb, ((0, Bp - B), (0, 0), (0, Np - N)))
    w3 = jnp.asarray(w).reshape(B, 1, N).astype(jnp.float32)
    w3 = jnp.pad(w3, ((0, Bp - B), (0, 0), (0, Np - N)))

    out = pl.pallas_call(
        gcn_kernel,
        out_shape=jax.ShapeDtypeStruct((Bp, C, Np), jnp.bfloat16),
        grid_spec=pltpu.PrefetchScalarGridSpec(
            num_scalar_prefetch=0,
            grid=(Bp // bt,),
            in_specs=[
                pl.BlockSpec((bt, C, Np), lambda i: (i, 0, 0)),   # x  (bf16)
                pl.BlockSpec((bt, 1, Np), lambda i: (i, 0, 0)),   # w  (f32)
                pl.BlockSpec((C, C), lambda i: (0, 0)),           # folded weight
                pl.BlockSpec((C, 1), lambda i: (0, 0)),           # folded shift
            ],
            out_specs=pl.BlockSpec((bt, C, Np), lambda i: (i, 0, 0)),
        ),
        compiler_params=pltpu.CompilerParams(
            dimension_semantics=("parallel",),
            vmem_limit_bytes=48 << 20),   # safe on v7x (64 MiB), ample elsewhere
    )(xb, w3, wc_fold, shift_fold)

    # slice off padding, back to NCHW [B, C, N, 1]; cast back for API fidelity
    # (callers wanting max perf can consume the bf16 kernel output directly).
    out = out[:B, :, :N].astype(out_dtype)
    return out[..., None]


def gcn_reference(x_nchw, w, conv_w, conv_b, gamma, beta, mean, var, eps=1e-5):
    """Pure-JAX reference mirroring the PyTorch module (eval-mode BN, f32)."""
    B, C, N, _ = x_nchw.shape
    hp = jax.lax.Precision.HIGHEST
    wv = jnp.maximum(jnp.tanh(w), 0.0)                                  # [B, N]
    A = wv[:, :, None] * wv[:, None, :] + jnp.eye(N, dtype=x_nchw.dtype)[None]
    dinv = (1.0 / jnp.sum(A, axis=-1)) ** 0.5                           # [B, N]
    L = dinv[:, :, None] * A * dinv[:, None, :]                         # [B, N, N]
    x_nc = jnp.transpose(x_nchw[..., 0], (0, 2, 1))                     # [B, N, C]
    y = jnp.einsum('bij,bjc->bic', L, x_nc, precision=hp)               # [B, N, C]
    y_cn = jnp.transpose(y, (0, 2, 1))                                  # [B, C, N]
    z = jnp.einsum('oc,bcn->bon', conv_w, y_cn, precision=hp)
    z = z + conv_b[None, :, None]
    z = (z - mean[None, :, None]) / jnp.sqrt(var[None, :, None] + eps)
    z = z * gamma[None, :, None] + beta[None, :, None]
    return jnp.maximum(z, 0.0)[..., None]


if __name__ == "__main__":
    key = jax.random.PRNGKey(0)
    B, C, N = 2, 8, 16        # in_channel = C = 8, N nodes

    k1, k2, k3, k4, k5, k6 = jax.random.split(key, 6)
    x = jax.random.normal(k1, (B, C, N, 1), jnp.float32)
    w = jax.random.normal(k2, (B, N), jnp.float32)

    # deterministic parameter init (Conv2d C->C 1x1 kernel stored as [C, C])
    conv_w = jax.random.normal(k3, (C, C), jnp.float32) * (1.0 / jnp.sqrt(C))
    conv_b = 0.1 * jax.random.normal(k4, (C,), jnp.float32)
    bn_gamma = 1.0 + 0.1 * jax.random.normal(k5, (C,), jnp.float32)
    bn_beta = 0.1 * jax.random.normal(k6, (C,), jnp.float32)
    bn_mean = jnp.zeros((C,), jnp.float32)
    bn_var = jnp.ones((C,), jnp.float32)

    out = gcn_forward(x, w, conv_w, conv_b, bn_gamma, bn_beta, bn_mean, bn_var)
    out = jax.block_until_ready(out)
    assert out.shape == (B, C, N, 1), out.shape
    assert bool(jnp.all(jnp.isfinite(out)))

    # Correctness vs. the dense [N,N] f32 reference.  Tolerance budgets the
    # bf16 HBM I/O and bf16 MXU operands (f32 accumulate) used by the kernel.
    ref = gcn_reference(x, w, conv_w, conv_b, bn_gamma, bn_beta, bn_mean, bn_var)
    max_err = float(jnp.max(jnp.abs(out - ref)))
    assert jnp.allclose(out, ref, atol=5e-2, rtol=5e-2), max_err

    print("KERNEL_OK")
</pallas_src>

<mosaic_0001>
module attributes {stable_mosaic.version = 11 : i64} {
  func.func @gcn_kernel(%arg0: i32, %arg1: memref<1x8x128xbf16, #tpu.memory_space<vmem>>, %arg2: memref<1x1x128xf32, #tpu.memory_space<vmem>>, %arg3: memref<8x8xbf16, #tpu.memory_space<vmem>>, %arg4: memref<8x1xf32, #tpu.memory_space<vmem>>, %arg5: memref<1x8x128xbf16, #tpu.memory_space<vmem>>) attributes {dimension_semantics = [#tpu.dimension_semantics<parallel>], iteration_bounds = array<i64: 2>, scalar_prefetch = 0 : i64, scratch_operands = 0 : i64, tpu.core_type = #tpu.core_type<tc>, window_params = [{transform_indices = @transform_0, window_bounds = array<i64: 1, 8, 128>}, {transform_indices = @transform_1, window_bounds = array<i64: 1, 1, 128>}, {pipeline_mode = #tpu.pipeline_mode<synchronous>, transform_indices = @transform_2, window_bounds = array<i64: 8, 8>}, {pipeline_mode = #tpu.pipeline_mode<synchronous>, transform_indices = @transform_3, window_bounds = array<i64: 8, 1>}, {transform_indices = @transform_4, window_bounds = array<i64: 1, 8, 128>}]} {
    %c0 = arith.constant 0 : index
    %c0_0 = arith.constant 0 : index
    %c0_1 = arith.constant 0 : index
    %0 = vector.load %arg2[%c0, %c0_0, %c0_1] : memref<1x1x128xf32, #tpu.memory_space<vmem>>, vector<1x1x128xf32>
    %1 = math.tanh %0 : vector<1x1x128xf32>
    %cst = arith.constant 0.000000e+00 : f32
    %2 = vector.broadcast %cst : f32 to vector<1x1x128xf32>
    %3 = arith.maximumf %1, %2 : vector<1x1x128xf32>
    %cst_2 = arith.constant dense<0.000000e+00> : vector<1x1xf32>
    %4 = vector.multi_reduction <add>, %3, %cst_2 [2] : vector<1x1x128xf32> to vector<1x1xf32>
    %5 = vector.shape_cast %4 : vector<1x1xf32> to vector<1x1x1xf32>
    %6 = vector.broadcast %5 : vector<1x1x1xf32> to vector<1x1x128xf32>
    %7 = arith.mulf %3, %6 : vector<1x1x128xf32>
    %cst_3 = arith.constant 1.000000e+00 : f32
    %8 = vector.broadcast %cst_3 : f32 to vector<1x1x128xf32>
    %9 = arith.addf %7, %8 : vector<1x1x128xf32>
    %10 = math.rsqrt %9 : vector<1x1x128xf32>
    %11 = arith.mulf %3, %10 : vector<1x1x128xf32>
    %12 = arith.mulf %10, %10 : vector<1x1x128xf32>
    %c0_4 = arith.constant 0 : index
    %c0_5 = arith.constant 0 : index
    %13 = vector.load %arg3[%c0_4, %c0_5] : memref<8x8xbf16, #tpu.memory_space<vmem>>, vector<8x8xbf16>
    %c0_6 = arith.constant 0 : index
    %c0_7 = arith.constant 0 : index
    %14 = vector.load %arg4[%c0_6, %c0_7] : memref<8x1xf32, #tpu.memory_space<vmem>>, vector<8x1xf32>
    %c0_8 = arith.constant 0 : index
    %c0_9 = arith.constant 0 : index
    %c0_10 = arith.constant 0 : index
    %15 = vector.load %arg1[%c0_8, %c0_9, %c0_10] : memref<1x8x128xbf16, #tpu.memory_space<vmem>>, vector<1x8x128xbf16>
    %16 = vector.shape_cast %15 : vector<1x8x128xbf16> to vector<8x128xbf16>
    %17 = arith.extf %16 : vector<8x128xbf16> to vector<8x128xf32>
    %18 = vector.shape_cast %11 : vector<1x1x128xf32> to vector<1x128xf32>
    %19 = vector.broadcast %18 : vector<1x128xf32> to vector<8x128xf32>
    %20 = arith.mulf %17, %19 : vector<8x128xf32>
    %cst_11 = arith.constant dense<0.000000e+00> : vector<8xf32>
    %21 = vector.multi_reduction <add>, %20, %cst_11 [1] : vector<8x128xf32> to vector<8xf32>
    %22 = vector.shape_cast %21 : vector<8xf32> to vector<8x1xf32>
    %23 = vector.broadcast %22 : vector<8x1xf32> to vector<8x128xf32>
    %24 = vector.broadcast %18 : vector<1x128xf32> to vector<8x128xf32>
    %25 = arith.mulf %23, %24 : vector<8x128xf32>
    %26 = vector.shape_cast %12 : vector<1x1x128xf32> to vector<1x128xf32>
    %27 = vector.broadcast %26 : vector<1x128xf32> to vector<8x128xf32>
    %28 = arith.mulf %17, %27 : vector<8x128xf32>
    %29 = arith.addf %25, %28 : vector<8x128xf32>
    %30 = arith.truncf %29 : vector<8x128xf32> to vector<8x128xbf16>
    %cst_12 = arith.constant dense<0.000000e+00> : vector<8x128xf32>
    %31 = tpu.matmul %13, %30, %cst_12 {dimension_numbers = #tpu.dot_dimension_numbers<[1], [0], [0], [1], [0, 0, 1, 1], [], []>} : vector<8x8xbf16>, vector<8x128xbf16>, vector<8x128xf32> -> vector<8x128xf32>
    %32 = vector.broadcast %14 : vector<8x1xf32> to vector<8x128xf32>
    %33 = arith.addf %31, %32 : vector<8x128xf32>
    %cst_13 = arith.constant 0.000000e+00 : f32
    %34 = vector.broadcast %cst_13 : f32 to vector<8x128xf32>
    %35 = arith.maximumf %33, %34 : vector<8x128xf32>
    %36 = arith.truncf %35 : vector<8x128xf32> to vector<8x128xbf16>
    %c0_14 = arith.constant 0 : index
    %c0_15 = arith.constant 0 : index
    %c0_16 = arith.constant 0 : index
    %37 = vector.load %arg5[%c0_14, %c0_15, %c0_16] : memref<1x8x128xbf16, #tpu.memory_space<vmem>>, vector<1x8x128xbf16>
    %38 = vector.shape_cast %37 : vector<1x8x128xbf16> to vector<8x128xbf16>
    %39 = vector.shape_cast %36 : vector<8x128xbf16> to vector<1x8x128xbf16>
    tpu.vector_store %arg5[%c0_14, %c0_15, %c0_16], %39 {strides = array<i32>} : memref<1x8x128xbf16, #tpu.memory_space<vmem>>, vector<1x8x128xbf16>,
    return
  }
  func.func @transform_0(%arg0: i32) -> (i32, i32, i32) {
    %c0_i32 = arith.constant 0 : i32
    %c0_i32_0 = arith.constant 0 : i32
    %c0_i32_1 = arith.constant 0 : i32
    return %arg0, %c0_i32, %c0_i32_0 : i32, i32, i32
  }
  func.func @transform_1(%arg0: i32) -> (i32, i32, i32) {
    %c0_i32 = arith.constant 0 : i32
    %c0_i32_0 = arith.constant 0 : i32
    %c0_i32_1 = arith.constant 0 : i32
    return %arg0, %c0_i32, %c0_i32_0 : i32, i32, i32
  }
  func.func @transform_2(%arg0: i32) -> (i32, i32) {
    %c0_i32 = arith.constant 0 : i32
    %c0_i32_0 = arith.constant 0 : i32
    %c0_i32_1 = arith.constant 0 : i32
    return %c0_i32, %c0_i32_0 : i32, i32
  }
  func.func @transform_3(%arg0: i32) -> (i32, i32) {
    %c0_i32 = arith.constant 0 : i32
    %c0_i32_0 = arith.constant 0 : i32
    %c0_i32_1 = arith.constant 0 : i32
    return %c0_i32, %c0_i32_0 : i32, i32
  }
  func.func @transform_4(%arg0: i32) -> (i32, i32, i32) {
    %c0_i32 = arith.constant 0 : i32
    %c0_i32_0 = arith.constant 0 : i32
    %c0_i32_1 = arith.constant 0 : i32
    return %arg0, %c0_i32, %c0_i32_0 : i32, i32, i32
  }
}

</mosaic_0001>

<llo_original>
// kernel: tpu_custom_call.1
$region0: #{tpu_custom_call.1}
  #allocation0 [shape = 'u32[]', space=smem, size = 0x4, offset = 0x4, fixed_abs, tag = 'smem constant byte address 0x4 - core index']
  #allocation1 [shape = 'u32[144,128]{1,0:T(1,128)}', space=vmem, size = 0x12000, scoped, tag = 'internal scratch']
  %s0 = inlined_call_operand.vmem [shape: bf16[2,8,128], index: 0, kind: input, shape index: {}]
  %s1 = inlined_call_operand.hbm [shape: f32[2,1,128], index: 1, kind: input, shape index: {}]
  %s2 = inlined_call_operand.vmem [shape: bf16[8,8], index: 2, kind: input, shape index: {}]
  %s3 = inlined_call_operand.vmem [shape: f32[8,1], index: 3, kind: input, shape index: {}]
  %s4 = inlined_call_operand.hbm [shape: bf16[2,8,128], index: 4, kind: output, shape index: {}]
  %s5 = sld [smem:[#allocation0]]
  $region53: #{tpu_custom_call.1} parent=0
    _
  %s7 = ssub.s32 1, %s5
  %s8 = scalar_select 0, %s7, %s5
  $region1: #{tpu_custom_call.1} parent=0
    #allocation2 [shape = 'u8[1024]{0}', space=vmem, size = 0x400, scoped, tag = 'input window, operand 1']
    #allocation3 [shape = 's32[2]{0}', space=sflag, size = 0x8, scoped, tag = 'scoped memory for tpu_custom_call.1']
    #allocation4 [shape = 's32[2]{0}', space=sflag, size = 0x8, scoped, tag = 'scoped memory for tpu_custom_call.1']
    #allocation5 [shape = 'u8[4096]{0}', space=vmem, size = 0x1000, scoped, tag = 'output window, operand 0']
    %9 = vsyncpa [#allocation3], 0
    %s10 = scalar_lea.sflag [#allocation3], 1
    %11 = vsyncpa %s10, 0
    %12 = vsyncpa [#allocation4], 0
    %s13 = scalar_lea.sflag [#allocation4], 1
    %14 = vsyncpa %s13, 0
    loop: start=0, step=1, limit=4
    $region2: #{tpu_custom_call.1} parent=1 // loop_pre_header
      _
    $region3: #{tpu_custom_call.1} parent=1 // loop_header
      %s16 = sphi 0, %s20
      %p17 = scmp.ge.s32.totalorder %s16, 4
      %s26 = sphi 0, %s28
      %s29 = sphi 0, %s26
      %s30 = sphi 0, %s29
      %s46 = sphi 0, %s30
      %s52 = sphi 0, %s54
      %s55 = sphi 0, %s52
      %s56 = sphi 0, %s55
      %s72 = sphi 0, %s56
      %s76 = sphi 0, %s76
      %s78 = sphi 0, %s76
      %s79 = sphi 0, %s78
      %s93 = sphi 0, %s79
      %s97 = sphi 0, %s97
      %s99 = sphi 0, %s97
      %s100 = sphi 0, %s99
      %s114 = sphi 0, %s100
      %s120 = sphi 0, %s122
      %s123 = sphi 0, %s120
      %s124 = sphi 0, %s123
      %s140 = sphi 0, %s124
    $region4: #{tpu_custom_call.1} parent=1 // loop_header_branch
      %19 = sbr.rel (%p17) target = $region8
    $region5: #{tpu_custom_call.1} parent=1 // loop_body
      %s21 = ssub.s32 %s16, 1
      %s22 = ssub.s32 %s16, 2
      %s23 = sadd.s32 %s16, 1
      %s24 = ssub.s32 %s16, %s23
      %p25 = scmp.eq.s32.totalorder %s24, 0
      %s27 = sadd.s32 %s26, 1
      %s28 = scalar_select %p25, %s26, %s27
      %p31 = pneg %p25
      %p32 = scmp.eq.s32.totalorder %s16, 1
      %p33 = por %p31, %p32
      %p34 = scmp.ne.s32.totalorder %s26, %s29
      %p35 = scmp.eq.s32.totalorder %s16, 0
      %p36 = por %p34, %p35
      %p37 = scmp.ne.s32.totalorder %s26, %s29
      %p38 = scmp.eq.s32.totalorder %s21, 1
      %p39 = por %p37, %p38
      %p40 = scmp.ne.s32.totalorder %s29, %s30
      %p41 = scmp.eq.s32.totalorder %s21, 0
      %p42 = por %p40, %p41
      %p43 = scmp.ne.s32.totalorder %s29, %s30
      %p44 = scmp.eq.s32.totalorder %s22, 1
      %p45 = por %p43, %p44
      %p47 = scmp.ne.s32.totalorder %s30, %s46
      %p48 = scmp.eq.s32.totalorder %s22, 0
      %p49 = por %p47, %p48
      %s50 = ssub.s32 %s16, %s23
      %p51 = scmp.eq.s32.totalorder %s50, 0
      %s53 = sadd.s32 %s52, 1
      %s54 = scalar_select %p51, %s52, %s53
      %p57 = pneg %p51
      %p58 = scmp.eq.s32.totalorder %s16, 1
      %p59 = por %p57, %p58
      %p60 = scmp.ne.s32.totalorder %s52, %s55
      %p61 = scmp.eq.s32.totalorder %s16, 0
      %p62 = por %p60, %p61
      %p63 = scmp.ne.s32.totalorder %s52, %s55
      %p64 = scmp.eq.s32.totalorder %s21, 1
      %p65 = por %p63, %p64
      %p66 = scmp.ne.s32.totalorder %s55, %s56
      %p67 = scmp.eq.s32.totalorder %s21, 0
      %p68 = por %p66, %p67
      %p69 = scmp.ne.s32.totalorder %s55, %s56
      %p70 = scmp.eq.s32.totalorder %s22, 1
      %p71 = por %p69, %p70
      %p73 = scmp.ne.s32.totalorder %s56, %s72
      %p74 = scmp.eq.s32.totalorder %s22, 0
      %p75 = por %p73, %p74
      %s77 = sadd.s32 %s76, 1
      %p80 = scmp.eq.s32.totalorder %s16, 1
      %p81 = scmp.ne.s32.totalorder %s76, %s78
      %p82 = scmp.eq.s32.totalorder %s16, 0
      %p83 = por %p81, %p82
      %p84 = scmp.ne.s32.totalorder %s76, %s78
      %p85 = scmp.eq.s32.totalorder %s21, 1
      %p86 = por %p84, %p85
      %p87 = scmp.ne.s32.totalorder %s78, %s79
      %p88 = scmp.eq.s32.totalorder %s21, 0
      %p89 = por %p87, %p88
      %p90 = scmp.ne.s32.totalorder %s78, %s79
      %p91 = scmp.eq.s32.totalorder %s22, 1
      %p92 = por %p90, %p91
      %p94 = scmp.ne.s32.totalorder %s79, %s93
      %p95 = scmp.eq.s32.totalorder %s22, 0
      %p96 = por %p94, %p95
      %s98 = sadd.s32 %s97, 1
      %p101 = scmp.eq.s32.totalorder %s16, 1
      %p102 = scmp.ne.s32.totalorder %s97, %s99
      %p103 = scmp.eq.s32.totalorder %s16, 0
      %p104 = por %p102, %p103
      %p105 = scmp.ne.s32.totalorder %s97, %s99
      %p106 = scmp.eq.s32.totalorder %s21, 1
      %p107 = por %p105, %p106
      %p108 = scmp.ne.s32.totalorder %s99, %s100
      %p109 = scmp.eq.s32.totalorder %s21, 0
      %p110 = por %p108, %p109
      %p111 = scmp.ne.s32.totalorder %s99, %s100
      %p112 = scmp.eq.s32.totalorder %s22, 1
      %p113 = por %p111, %p112
      %p115 = scmp.ne.s32.totalorder %s100, %s114
      %p116 = scmp.eq.s32.totalorder %s22, 0
      %p117 = por %p115, %p116
      %s118 = ssub.s32 %s16, %s23
      %p119 = scmp.eq.s32.totalorder %s118, 0
      %s121 = sadd.s32 %s120, 1
      %s122 = scalar_select %p119, %s120, %s121
      %p125 = pneg %p119
      %p126 = scmp.eq.s32.totalorder %s16, 1
      %p127 = por %p125, %p126
      %p128 = scmp.ne.s32.totalorder %s120, %s123
      %p129 = scmp.eq.s32.totalorder %s16, 0
      %p130 = por %p128, %p129
      %p131 = scmp.ne.s32.totalorder %s120, %s123
      %p132 = scmp.eq.s32.totalorder %s21, 1
      %p133 = por %p131, %p132
      %p134 = scmp.ne.s32.totalorder %s123, %s124
      %p135 = scmp.eq.s32.totalorder %s21, 0
      %p136 = por %p134, %p135
      %p137 = scmp.ne.s32.totalorder %s123, %s124
      %p138 = scmp.eq.s32.totalorder %s22, 1
      %p139 = por %p137, %p138
      %p141 = scmp.ne.s32.totalorder %s124, %s140
      %p142 = scmp.eq.s32.totalorder %s22, 0
      %p143 = por %p141, %p142
      %p144 = scmp.le.s32.totalorder 1, %s16
      %p145 = scmp.lt.s32.totalorder %s16, 3
      %p146 = pnand %p144, %p145
      %p147 = pneg %p146
      // Predicated region
      $region9: #{tpu_custom_call.1} parent=5 // pred_check
        _
      $region10: #{tpu_custom_call.1} parent=5 // pred_check_branch
        %149 = sbr.rel (%p146) target = $region12
      $region11: #{tpu_custom_call.1} parent=5 // pred_region
        %s150 = ssub.s32 %s16, 1
        // Predicated region
        $region13: #{tpu_custom_call.1} parent=11 // pred_check
          %p151 = pneg %p89
        $region14: #{tpu_custom_call.1} parent=11 // pred_check_branch
          %153 = sbr.rel (%p151) target = $region16
        $region15: #{tpu_custom_call.1} parent=11 // pred_region
          _
        $region16: #{tpu_custom_call.1} parent=11 // pred_fallthru
          _
        // Predicated region
        $region17: #{tpu_custom_call.1} parent=11 // pred_check
          %p154 = pneg %p110
        $region18: #{tpu_custom_call.1} parent=11 // pred_check_branch
          %156 = sbr.rel (%p154) target = $region20
        $region19: #{tpu_custom_call.1} parent=11 // pred_region
          _
        $region20: #{tpu_custom_call.1} parent=11 // pred_fallthru
          _
      $region12: #{tpu_custom_call.1} parent=5 // pred_fallthru
        _
      %p157 = scmp.lt.s32.totalorder %s16, 2
      // Predicated region
      $region21: #{tpu_custom_call.1} parent=5 // pred_check
        %p158 = pneg %p157
      $region22: #{tpu_custom_call.1} parent=5 // pred_check_branch
        %160 = sbr.rel (%p158) target = $region24
      $region23: #{tpu_custom_call.1} parent=5 // pred_region
        // Predicated region
        $region25: #{tpu_custom_call.1} parent=23 // pred_check
          %p161 = pneg %p36
        $region26: #{tpu_custom_call.1} parent=23 // pred_check_branch
          %163 = sbr.rel (%p161) target = $region28
        $region27: #{tpu_custom_call.1} parent=23 // pred_region
          %p164 = scmp.lt.s32.totalorder %s16, 1
          %s165 = scalar_select %p164, %s16, 1
          %s166 = smul.addr %s165, 4
          %s167 = scalar_lea.vmem %s0, %s166
        $region28: #{tpu_custom_call.1} parent=23 // pred_fallthru
          _
        // Predicated region
        $region29: #{tpu_custom_call.1} parent=23 // pred_check
          %p168 = pneg %p62
        $region30: #{tpu_custom_call.1} parent=23 // pred_check_branch
          %170 = sbr.rel (%p168) target = $region32
        $region31: #{tpu_custom_call.1} parent=23 // pred_region
          %s171 = sand.u32 %s52, 1
          %s172 = scalar_lea.sflag [#allocation3], %s171
          %s173 = sand.u32 %s52, 1
          %s174 = scalar_lea.vmem [#allocation2], %s173
          %s176 = ssub.s32 16, 16
          %177 = vsyncadd %s172, %s176
          %s178 = smul.addr %s16, 16
          %s179 = scalar_lea.hbm %s1, %s178
          %s181 = sshll.u32 %s174, 4
          %s182 = int_to_ptr.vmem [resolvable:$true] %s181
          %184 = dma.hbm_to_vmem [thread:$0]  %s179, 16, %s182, %s172
        $region32: #{tpu_custom_call.1} parent=23 // pred_fallthru
          _
      $region24: #{tpu_custom_call.1} parent=5 // pred_fallthru
        _
      %p185 = scmp.le.s32.totalorder 1, %s16
      %p186 = scmp.lt.s32.totalorder %s16, 3
      %p187 = pnand %p185, %p186
      %p188 = pneg %p187
      // Predicated region
      $region33: #{tpu_custom_call.1} parent=5 // pred_check
        _
      $region34: #{tpu_custom_call.1} parent=5 // pred_check_branch
        %190 = sbr.rel (%p187) target = $region36
      $region35: #{tpu_custom_call.1} parent=5 // pred_region
        %s191 = ssub.s32 %s16, 1
        %s192 = sand.u32 %s55, 1
        %s193 = scalar_lea.sflag [#allocation3], %s192
        %s194 = sand.u32 %s55, 1
        %s195 = scalar_lea.vmem [#allocation2], %s194
        // Predicated region
        $region37: #{tpu_custom_call.1} parent=35 // pred_check
          %p196 = pneg %p68
        $region38: #{tpu_custom_call.1} parent=35 // pred_check_branch
          %198 = sbr.rel (%p196) target = $region40
        $region39: #{tpu_custom_call.1} parent=35 // pred_region
          %199 = dma.done %s193, 16
        $region40: #{tpu_custom_call.1} parent=35 // pred_fallthru
          _
        %p200 = scmp.lt.s32.totalorder %s21, 1
        %s201 = scalar_select %p200, %s21, 1
        %s202 = smul.addr %s201, 4
        %s203 = scalar_lea.vmem %s0, %s202
        %p204 = pneg %p42
        %p205 = pneg %p39
        %s206 = sand.u32 %s55, 1
        %s207 = scalar_lea.sflag [#allocation3], %s206
        %s208 = sand.u32 %s55, 1
        %s209 = scalar_lea.vmem [#allocation2], %s208
        %p210 = pneg %p68
        %p211 = pneg %p65
        %p212 = pneg %p89
        %p213 = pneg %p86
        %p214 = pneg %p110
        %p215 = pneg %p107
        %p216 = pneg %p136
        %p217 = pneg %p133
        %s218 = sand.u32 %s123, 1
        %s219 = scalar_lea.sflag [#allocation4], %s218
        %s220 = sand.u32 %s123, 1
        %s221 = smul.addr %s220, 4
        %s222 = scalar_lea.vmem [#allocation5], %s221
        %p223 = scmp.lt.s32.totalorder %s21, 1
        %s224 = scalar_select %p223, %s21, 1
        %s225 = smul.addr %s224, 4
        %s226 = scalar_lea.vmem %s0, %s225
        %v228 = vld [vmem:[%s195] sm:$0x1]
        %v229 = vtanh.pop %v228
        %v230 = vmax.f32 %v229, 0.0
        %vm231 = vcmask 1040384
        %v232 = vsel %vm231, %v230, 0.0
        %233 = vadd.xlane.f32.xlu0 %v232
        %v234 = vpop.xlane.xlu0 %233
        %v235 = vmul.f32 %v230, %v234
        %v236 = vadd.f32 %v235, 1.0
        %v237 = vrsqrt.pop %v236
        %v238 = vmul.f32 %v230, %v237
        %v239 = vmul.f32 %v237, %v237
        %v240 = vld [vmem:[%s2] sm:$0xf]
        %v241 = vld [vmem:[%s3] sm:$0xff]
        %v242 = vld [vmem:[%s226] sm:$0xf]
        %v243 = vunpack.c.l.bf16 %v242
        %v245 = vlaneseq
        %v246 = vshrl.u32 %v245, 7
        %v247 = vsub.s32 0, %v246
        %v248 = vrot.slane %v238, %v247
        %v250 = vmul.f32 %v243, %v248
        %251 = vadd.xlane.f32.xlu0 %v250
        %v252 = vpop.xlane.xlu0 %251
        %v253 = vmul.f32 %v252, %v248
        %v255 = vlaneseq
        %v256 = vshrl.u32 %v255, 7
        %v257 = vsub.s32 0, %v256
        %v258 = vrot.slane %v239, %v257
        %v260 = vmul.f32 %v243, %v258
        %v261 = vadd.f32 %v253, %v260
        %v262 = vpack.c.bf16 %v261, %v261
        %264 = vset.pattern.permute.xlu0 0
        %265 = vperm.xlu0 %264, %v241
        %v266 = vpop.permute.xlu0 %265
        %vm268 = vcmask 64512
        %v270 = vsel %vm268, %v240, 0
        %vm272 = vcmask 1043456
        %v274 = vsel %vm272, %v262, 0
        %276 = vmatprep.subr.bf16.mxu0 0
        %277 = vmatpush1.bf16.msra.mxu0 %v274
        %278 = vmatprep.subr.bf16.mxu0 0
        %279 = vmatpush1.bf16.msra.mxu0 0
        %280 = vmatprep.subr.bf16.mxu0 0
        %281 = vmatpush1.bf16.msra.mxu0 0
        %282 = vmatprep.subr.bf16.mxu0 0
        %283 = vmatpush1.bf16.msra.mxu0 0
        %284 = vmatprep.subr.bf16.mxu0 0
        %285 = vmatpush1.bf16.msra.mxu0 0
        %286 = vmatprep.subr.bf16.mxu0 0
        %287 = vmatpush1.bf16.msra.mxu0 0
        %288 = vmatprep.subr.bf16.mxu0 0
        %289 = vmatpush1.bf16.msra.mxu0 0
        %290 = vmatprep.subr.bf16.mxu0 0
        %291 = vmatpush1.bf16.msra.mxu0 0
        %292 = vmatprep.subr.bf16.mxu0 0
        %293 = vmatpush1.bf16.msra.mxu0 0
        %294 = vmatprep.subr.bf16.mxu0 0
        %295 = vmatpush1.bf16.msra.mxu0 0
        %296 = vmatprep.subr.bf16.mxu0 0
        %297 = vmatpush1.bf16.msra.mxu0 0
        %298 = vmatprep.subr.bf16.mxu0 0
        %299 = vmatpush1.bf16.msra.mxu0 0
        %300 = vmatprep.subr.bf16.mxu0 0
        %301 = vmatpush1.bf16.msra.mxu0 0
        %302 = vmatprep.subr.bf16.mxu0 0
        %303 = vmatpush1.bf16.msra.mxu0 0
        %304 = vmatprep.subr.bf16.mxu0 0
        %305 = vmatpush1.bf16.msra.mxu0 0
        %306 = vmatprep.subr.bf16.mxu0 0
        %307 = vmatpush1.bf16.msra.mxu0 0
        %308 = vmatprep.mubr.bf16.mxu0 0
        %309 = vmatmul.mubr.bf16.gmra.mrb[0].mxu0 %v270
        %v310 = vpop.f32.mrb[0].mxu0
        %v311 = vadd.f32 %v266, %v310
        %v312 = vpop.f32.mrb[0].mxu0
        %v313 = vpop.f32.mrb[0].mxu0
        %v314 = vpop.f32.mrb[0].mxu0
        %315 = vdwg.mxu0
        %v316 = vmax.f32 %v311, 0.0
        %v317 = vpack.c.bf16 %v316, %v316
        %318 = vst [vmem:[%s222] sm:$0xf] %v317
        %s319 = sand.u32 %s123, 1
        %s320 = scalar_lea.sflag [#allocation4], %s319
        %s321 = sand.u32 %s123, 1
        %s322 = smul.addr %s321, 4
        %s323 = scalar_lea.vmem [#allocation5], %s322
        // Predicated region
        $region41: #{tpu_custom_call.1} parent=35 // pred_check
          %p324 = pneg %p133
        $region42: #{tpu_custom_call.1} parent=35 // pred_check_branch
          %326 = sbr.rel (%p324) target = $region44
        $region43: #{tpu_custom_call.1} parent=35 // pred_region
          %s328 = ssub.s32 64, 64
          %329 = vsyncadd %s320, %s328
          %s330 = smul.addr %s21, 64
          %s331 = scalar_lea.hbm %s4, %s330
          %s333 = sshll.u32 %s323, 4
          %s334 = int_to_ptr.vmem [resolvable:$true] %s333
          %336 = dma.vmem_to_hbm [thread:$0]  %s334, 64, %s331, %s320
        $region44: #{tpu_custom_call.1} parent=35 // pred_fallthru
          _
      $region36: #{tpu_custom_call.1} parent=5 // pred_fallthru
        _
      %p337 = scmp.le.s32.totalorder 2, %s16
      // Predicated region
      $region45: #{tpu_custom_call.1} parent=5 // pred_check
        %p338 = pneg %p337
      $region46: #{tpu_custom_call.1} parent=5 // pred_check_branch
        %340 = sbr.rel (%p338) target = $region48
      $region47: #{tpu_custom_call.1} parent=5 // pred_region
        %s341 = ssub.s32 %s16, 2
        // Predicated region
        $region49: #{tpu_custom_call.1} parent=47 // pred_check
          %p342 = pneg %p139
        $region50: #{tpu_custom_call.1} parent=47 // pred_check_branch
          %344 = sbr.rel (%p342) target = $region52
        $region51: #{tpu_custom_call.1} parent=47 // pred_region
          %s345 = sand.u32 %s124, 1
          %s346 = scalar_lea.sflag [#allocation4], %s345
          %s347 = sand.u32 %s124, 1
          %s348 = smul.addr %s347, 4
          %s349 = scalar_lea.vmem [#allocation5], %s348
          %350 = dma.done %s346, 64
        $region52: #{tpu_custom_call.1} parent=47 // pred_fallthru
          _
      $region48: #{tpu_custom_call.1} parent=5 // pred_fallthru
        _
    $region6: #{tpu_custom_call.1} parent=1 // loop_footer
      %s20 = sadd.s32 1, %s16
    $region7: #{tpu_custom_call.1} parent=1 // loop_footer_branch
      %15 = sbr.rel target = $region3
    $region8: #{tpu_custom_call.1} parent=1 // loop_exit
      _
    %351 = vsyncpa [#allocation3], 1
    %s352 = scalar_lea.sflag [#allocation3], 1
    %353 = vsyncpa %s352, 1
    %354 = vsyncpa [#allocation4], 1
    %s355 = scalar_lea.sflag [#allocation4], 1
    %356 = vsyncpa %s355, 1

</llo_original>
